<compile_context>
chip_gen: v6e
topology: v6e:2x2x1
jax: 0.10.0
libtpu: 0.0.40
codegen_flags: <defaults>
</compile_context>

<pallas_src>
import jax
import jax.numpy as jnp
from jax.experimental import pallas as pl
from jax.experimental.pallas import tpu as pltpu

EPS = 1e-5


def _make_kernel(n_total: int, tm: int, pred_dim: int, mm_dtype, needs_mask: bool):
    """Build the 2-phase predictor kernel for a fixed batch size / tile."""
    inv_n = 1.0 / float(n_total)

    def kernel(x_ref, w1_ref, gb_ref, w2_ref, b2_ref, o_ref,
               h_ref, sum_ref, sq_ref, ss_ref):
        phase = pl.program_id(0)   # 0: matmul-1 + stats, 1: BN+ReLU+matmul-2
        tile = pl.program_id(1)    # batch row-tile index

        # ---------------- phase 0: x @ w1 into resident h, accumulate stats
        @pl.when(phase == 0)
        def _():
            @pl.when(tile == 0)
            def _():
                sum_ref[...] = jnp.zeros_like(sum_ref)
                sq_ref[...] = jnp.zeros_like(sq_ref)

            # In-kernel cast: cheap VPU work hidden under the MXU, avoids an
            # extra wrapper-side HBM pass over x.
            x_tile = x_ref[...].astype(mm_dtype)
            h = jnp.dot(x_tile, w1_ref[...],
                        preferred_element_type=jnp.float32)   # (tm, pred_dim) f32

            if needs_mask:
                # Ragged last tile: zero rows past the real batch for stats.
                row = tile * tm + jax.lax.broadcasted_iota(jnp.int32, (tm, 1), 0)
                h_stat = jnp.where(row < n_total, h, 0.0)
            else:
                h_stat = h

            # Sublane-group partial sums -> full (8, pred_dim) unmasked stores,
            # and the tm-row reduction becomes pure VALU adds.
            hg = h_stat.reshape(tm // 8, 8, pred_dim)
            sum_ref[...] += jnp.sum(hg, axis=0)
            sq_ref[...] += jnp.sum(hg * hg, axis=0)

            row0 = pl.multiple_of(tile * tm, tm)
            h_ref[pl.ds(row0, tm), :] = h.astype(h_ref.dtype)

        # ---------------- phase 1: fused BN scale/shift + ReLU + h @ w2 + b2
        @pl.when(phase == 1)
        def _():
            @pl.when(tile == 0)
            def _():
                # Fuse BatchNorm into one per-feature scale/shift, once.
                s = jnp.sum(sum_ref[...], axis=0, keepdims=True)    # (1, pred_dim)
                sq = jnp.sum(sq_ref[...], axis=0, keepdims=True)
                mean = s * inv_n
                var = jnp.maximum(sq * inv_n - mean * mean, 0.0)    # biased var
                scale = gb_ref[0:1, :] * jax.lax.rsqrt(var + EPS)   # gamma*rsqrt
                ss_ref[0:1, :] = scale
                ss_ref[1:2, :] = gb_ref[1:2, :] - mean * scale      # beta - mean*scale

            row0 = pl.multiple_of(tile * tm, tm)
            h = h_ref[pl.ds(row0, tm), :].astype(jnp.float32)
            hn = jnp.maximum(h * ss_ref[0:1, :] + ss_ref[1:2, :], 0.0)
            out = jnp.dot(hn.astype(w2_ref.dtype), w2_ref[...],
                          preferred_element_type=jnp.float32)
            o_ref[...] = (out + b2_ref[...]).astype(o_ref.dtype)

    return kernel


def _vmem_capacity_bytes() -> int:
    """Generation-aware VMEM capacity; conservative fallback (v7x = 64 MiB)."""
    try:
        info = pltpu.get_tpu_info()
        cap = getattr(info, "vmem_capacity_bytes", None)
        if cap:
            return int(cap)
    except Exception:
        pass
    return 64 << 20


def _vmem_estimate(n_pad, dim, pred_dim, tm, x_bytes, mm_bytes, h_bytes, out_bytes):
    """Account for 2 pipeline buffers on EVERY input/output spec + scratches."""
    tile_bufs = 2 * tm * dim * (x_bytes + out_bytes)        # x in + out tiles
    weight_bufs = 2 * 2 * dim * pred_dim * mm_bytes          # w1 + w2 (dbl-buffered)
    vec_bufs = 2 * (8 * pred_dim + 8 * dim) * 4              # gb, b2 (sublane-padded)
    h_scratch = n_pad * pred_dim * h_bytes                   # resident h
    stat_scratch = (8 + 8 + 8) * pred_dim * 4                # sum, sumsq, scale/shift
    return tile_bufs + weight_bufs + vec_bufs + h_scratch + stat_scratch


_TILE_CANDIDATES = (512, 256, 128, 64, 32, 16, 8)            # MXU-aligned first


def _pick_batch_tile(n, dim, pred_dim, x_bytes, mm_bytes, h_bytes, out_bytes, budget):
    n8 = max(8, -(-n // 8) * 8)
    for tm in _TILE_CANDIDATES:
        if tm > n8:
            continue
        n_pad = -(-n // tm) * tm
        if _vmem_estimate(n_pad, dim, pred_dim, tm,
                          x_bytes, mm_bytes, h_bytes, out_bytes) <= budget:
            return tm
    return 8


def predictor_forward(x, w1_t, gamma, beta, w2_t, b2, *,
                      batch_tile=None, matmul_dtype=jnp.bfloat16, out_dtype=None):
    """x: (N, dim); w1_t: (dim, pred_dim); w2_t: (pred_dim, dim).

    matmul_dtype: MXU input dtype (default bf16 -- native on v5e/v6e/v7x);
    accumulation and BN statistics stay f32.  x is cast in-kernel.
    out_dtype: output dtype (default x.dtype).
    """
    n, dim = x.shape
    dim_w, pred_dim = w1_t.shape
    assert dim_w == dim and w2_t.shape == (pred_dim, dim)

    mm_dtype = jnp.dtype(matmul_dtype)
    out_dt = jnp.dtype(out_dtype) if out_dtype is not None else x.dtype
    h_dtype = jnp.dtype(jnp.bfloat16) if mm_dtype == jnp.dtype(jnp.bfloat16) \
        else jnp.dtype(jnp.float32)

    x_bytes = jnp.dtype(x.dtype).itemsize
    mm_bytes = mm_dtype.itemsize
    h_bytes = h_dtype.itemsize
    out_bytes = out_dt.itemsize

    budget = int(_vmem_capacity_bytes() * 0.75)

    if batch_tile is None:
        tm = _pick_batch_tile(n, dim, pred_dim,
                              x_bytes, mm_bytes, h_bytes, out_bytes, budget)
    else:
        tm = int(batch_tile)
        assert tm % 8 == 0, tm
    num_tiles = -(-n // tm)          # cdiv: ragged last tile is masked in-kernel
    n_pad = num_tiles * tm
    needs_mask = (n_pad != n)

    # Weights are small: cast once in the wrapper. x is cast in-kernel.
    w1_mm = w1_t.astype(mm_dtype)
    w2_mm = w2_t.astype(mm_dtype)
    gb = jnp.stack([gamma.reshape(-1), beta.reshape(-1)], axis=0).astype(jnp.float32)
    b2_row = b2.reshape(1, dim).astype(jnp.float32)

    kernel = _make_kernel(n, tm, pred_dim, mm_dtype, needs_mask)

    est = _vmem_estimate(n_pad, dim, pred_dim, tm,
                         x_bytes, mm_bytes, h_bytes, out_bytes)
    vmem_limit = min(max(est + (4 << 20), 32 << 20), budget)

    grid = (2, num_tiles)            # (phase, batch tile)
    last = num_tiles - 1
    in_specs = [
        # x advances with the tile index in phase 0; pinned to the LAST
        # phase-0 block in phase 1 so the phase boundary issues no extra DMA.
        pl.BlockSpec((tm, dim), lambda p, t: (t * (1 - p) + p * last, 0)),
        # Weights / BN vectors: constant index -> fetched once, stay resident.
        pl.BlockSpec((dim, pred_dim), lambda p, t: (0, 0)),
        pl.BlockSpec((2, pred_dim), lambda p, t: (0, 0)),
        pl.BlockSpec((pred_dim, dim), lambda p, t: (0, 0)),
        pl.BlockSpec((1, dim), lambda p, t: (0, 0)),
    ]
    # Output advances with the tile index only in phase 1.
    out_specs = pl.BlockSpec((tm, dim), lambda p, t: (t * p, 0))

    scratch_shapes = [
        pltpu.VMEM((n_pad, pred_dim), h_dtype),     # resident h = x @ w1
        pltpu.VMEM((8, pred_dim), jnp.float32),     # partial per-feature sums
        pltpu.VMEM((8, pred_dim), jnp.float32),     # partial sums of squares
        pltpu.VMEM((2, pred_dim), jnp.float32),     # fused [scale; shift]
    ]

    return pl.pallas_call(
        kernel,
        out_shape=jax.ShapeDtypeStruct((n, dim), out_dt),
        grid_spec=pltpu.PrefetchScalarGridSpec(
            num_scalar_prefetch=0,
            grid=grid,
            in_specs=in_specs,
            out_specs=out_specs,
            scratch_shapes=scratch_shapes),
        compiler_params=pltpu.CompilerParams(
            dimension_semantics=("arbitrary", "arbitrary"),
            vmem_limit_bytes=vmem_limit),
    )(x, w1_mm, gb, w2_mm, b2_row)


def reference_forward(x, w1_t, gamma, beta, w2_t, b2):
    h = x @ w1_t
    mean = h.mean(axis=0, keepdims=True)
    var = ((h - mean) ** 2).mean(axis=0, keepdims=True)   # biased, training-mode BN
    h = (h - mean) / jnp.sqrt(var + EPS) * gamma + beta
    h = jnp.maximum(h, 0.0)
    return h @ w2_t + b2


if __name__ == "__main__":
    # Small shapes consistent with the module (dim / pred_dim scaled down),
    # chosen to exercise multiple batch tiles and (8,128)-friendly blocks.
    N, DIM, PRED_DIM = 256, 256, 128

    key = jax.random.PRNGKey(0)
    kx, k1, k2, kb = jax.random.split(key, 4)

    x = jax.random.normal(kx, (N, DIM), dtype=jnp.float32)
    w1_t = jax.random.normal(k1, (DIM, PRED_DIM), dtype=jnp.float32) * (1.0 / DIM) ** 0.5
    gamma = jnp.ones((PRED_DIM,), dtype=jnp.float32)     # BatchNorm weight
    beta = jnp.zeros((PRED_DIM,), dtype=jnp.float32)     # BatchNorm bias
    w2_t = jax.random.normal(k2, (PRED_DIM, DIM), dtype=jnp.float32) * (1.0 / PRED_DIM) ** 0.5
    b2 = (jax.random.uniform(kb, (DIM,), dtype=jnp.float32) - 0.5) * 0.1

    ref = reference_forward(x, w1_t, gamma, beta, w2_t, b2)

    # 1) strict f32 path, multi-tile (4 tiles of 64 rows).
    out = predictor_forward(x, w1_t, gamma, beta, w2_t, b2,
                            batch_tile=64, matmul_dtype=jnp.float32)
    out = jax.block_until_ready(out)
    assert out.shape == (N, DIM) and out.dtype == jnp.float32
    assert jnp.allclose(out, ref, atol=1e-3, rtol=1e-3), \
        float(jnp.max(jnp.abs(out - ref)))

    # 2) default path: bf16 matmul inputs (all generations), auto tile,
    #    bf16 output (halves phase-1 store traffic); looser tolerance.
    out_bf = predictor_forward(x, w1_t, gamma, beta, w2_t, b2,
                               out_dtype=jnp.bfloat16)
    out_bf = jax.block_until_ready(out_bf)
    assert out_bf.shape == (N, DIM) and out_bf.dtype == jnp.bfloat16
    assert jnp.allclose(out_bf.astype(jnp.float32), ref, atol=2e-1, rtol=1e-1), \
        float(jnp.max(jnp.abs(out_bf.astype(jnp.float32) - ref)))

    # 3) ragged batch (N not a multiple of the tile): cdiv grid + masked last tile.
    Nr = 200
    xr = x[:Nr]
    ref_r = reference_forward(xr, w1_t, gamma, beta, w2_t, b2)
    out_r = predictor_forward(xr, w1_t, gamma, beta, w2_t, b2,
                              batch_tile=64, matmul_dtype=jnp.float32)
    out_r = jax.block_until_ready(out_r)
    assert out_r.shape == (Nr, DIM)
    assert jnp.allclose(out_r, ref_r, atol=1e-3, rtol=1e-3), \
        float(jnp.max(jnp.abs(out_r - ref_r)))

    print("KERNEL_OK")
</pallas_src>

<mosaic_0001>
module attributes {stable_mosaic.version = 11 : i64} {
  func.func @kernel(%arg0: i32, %arg1: i32, %arg2: memref<64x256xf32, #tpu.memory_space<vmem>>, %arg3: memref<256x128xf32, #tpu.memory_space<vmem>>, %arg4: memref<2x128xf32, #tpu.memory_space<vmem>>, %arg5: memref<128x256xf32, #tpu.memory_space<vmem>>, %arg6: memref<1x256xf32, #tpu.memory_space<vmem>>, %arg7: memref<64x256xf32, #tpu.memory_space<vmem>>, %arg8: memref<256x128xf32, #tpu.memory_space<vmem>>, %arg9: memref<8x128xf32, #tpu.memory_space<vmem>>, %arg10: memref<8x128xf32, #tpu.memory_space<vmem>>, %arg11: memref<2x128xf32, #tpu.memory_space<vmem>>) attributes {dimension_semantics = [#tpu.dimension_semantics<arbitrary>, #tpu.dimension_semantics<arbitrary>], iteration_bounds = array<i64: 2, 4>, scalar_prefetch = 0 : i64, scratch_operands = 4 : i64, tpu.core_type = #tpu.core_type<tc>, window_params = [{transform_indices = @transform_0, window_bounds = array<i64: 64, 256>}, {pipeline_mode = #tpu.pipeline_mode<synchronous>, transform_indices = @transform_1, window_bounds = array<i64: 256, 128>}, {pipeline_mode = #tpu.pipeline_mode<synchronous>, transform_indices = @transform_2, window_bounds = array<i64: 2, 128>}, {pipeline_mode = #tpu.pipeline_mode<synchronous>, transform_indices = @transform_3, window_bounds = array<i64: 128, 256>}, {pipeline_mode = #tpu.pipeline_mode<synchronous>, transform_indices = @transform_4, window_bounds = array<i64: 1, 256>}, {transform_indices = @transform_5, window_bounds = array<i64: 64, 256>}]} {
    %c0_i32 = arith.constant 0 : i32
    %0 = arith.cmpi eq, %arg0, %c0_i32 : i32
    %1 = arith.extui %0 : i1 to i32
    %c0_i32_0 = arith.constant 0 : i32
    %2 = arith.cmpi ne, %1, %c0_i32_0 : i32
    scf.if %2 {
      %c0_i32_2 = arith.constant 0 : i32
      %6 = arith.cmpi eq, %arg1, %c0_i32_2 : i32
      %7 = arith.extui %6 : i1 to i32
      %c0_i32_3 = arith.constant 0 : i32
      %8 = arith.cmpi ne, %7, %c0_i32_3 : i32
      scf.if %8 {
        %cst_18 = arith.constant 0.000000e+00 : f32
        %26 = vector.broadcast %cst_18 : f32 to vector<8x128xf32>
        %c0_19 = arith.constant 0 : index
        %c0_20 = arith.constant 0 : index
        %27 = vector.load %arg9[%c0_19, %c0_20] : memref<8x128xf32, #tpu.memory_space<vmem>>, vector<8x128xf32>
        tpu.vector_store %arg9[%c0_19, %c0_20], %26 {strides = array<i32>} : memref<8x128xf32, #tpu.memory_space<vmem>>, vector<8x128xf32>,
        %cst_21 = arith.constant 0.000000e+00 : f32
        %28 = vector.broadcast %cst_21 : f32 to vector<8x128xf32>
        %c0_22 = arith.constant 0 : index
        %c0_23 = arith.constant 0 : index
        %29 = vector.load %arg10[%c0_22, %c0_23] : memref<8x128xf32, #tpu.memory_space<vmem>>, vector<8x128xf32>
        tpu.vector_store %arg10[%c0_22, %c0_23], %28 {strides = array<i32>} : memref<8x128xf32, #tpu.memory_space<vmem>>, vector<8x128xf32>,
      } else {
      }
      %c0 = arith.constant 0 : index
      %c0_4 = arith.constant 0 : index
      %9 = vector.load %arg2[%c0, %c0_4] : memref<64x256xf32, #tpu.memory_space<vmem>>, vector<64x256xf32>
      %c0_5 = arith.constant 0 : index
      %c0_6 = arith.constant 0 : index
      %10 = vector.load %arg3[%c0_5, %c0_6] : memref<256x128xf32, #tpu.memory_space<vmem>>, vector<256x128xf32>
      %cst = arith.constant dense<0.000000e+00> : vector<64x128xf32>
      %11 = tpu.matmul %9, %10, %cst {dimension_numbers = #tpu.dot_dimension_numbers<[1], [0], [0], [1], [0, 0, 1, 1], [], []>} : vector<64x256xf32>, vector<256x128xf32>, vector<64x128xf32> -> vector<64x128xf32>
      %12 = vector.shape_cast %11 : vector<64x128xf32> to vector<8x8x128xf32>
      %c0_7 = arith.constant 0 : index
      %c0_8 = arith.constant 0 : index
      %13 = vector.load %arg9[%c0_7, %c0_8] : memref<8x128xf32, #tpu.memory_space<vmem>>, vector<8x128xf32>
      %cst_9 = arith.constant dense<0.000000e+00> : vector<8x128xf32>
      %14 = vector.multi_reduction <add>, %12, %cst_9 [0] : vector<8x8x128xf32> to vector<8x128xf32>
      %15 = arith.addf %13, %14 : vector<8x128xf32>
      %c0_10 = arith.constant 0 : index
      %c0_11 = arith.constant 0 : index
      %16 = vector.load %arg9[%c0_10, %c0_11] : memref<8x128xf32, #tpu.memory_space<vmem>>, vector<8x128xf32>
      tpu.vector_store %arg9[%c0_10, %c0_11], %15 {strides = array<i32>} : memref<8x128xf32, #tpu.memory_space<vmem>>, vector<8x128xf32>,
      %c0_12 = arith.constant 0 : index
      %c0_13 = arith.constant 0 : index
      %17 = vector.load %arg10[%c0_12, %c0_13] : memref<8x128xf32, #tpu.memory_space<vmem>>, vector<8x128xf32>
      %18 = arith.mulf %12, %12 : vector<8x8x128xf32>
      %cst_14 = arith.constant dense<0.000000e+00> : vector<8x128xf32>
      %19 = vector.multi_reduction <add>, %18, %cst_14 [0] : vector<8x8x128xf32> to vector<8x128xf32>
      %20 = arith.addf %17, %19 : vector<8x128xf32>
      %c0_15 = arith.constant 0 : index
      %c0_16 = arith.constant 0 : index
      %21 = vector.load %arg10[%c0_15, %c0_16] : memref<8x128xf32, #tpu.memory_space<vmem>>, vector<8x128xf32>
      tpu.vector_store %arg10[%c0_15, %c0_16], %20 {strides = array<i32>} : memref<8x128xf32, #tpu.memory_space<vmem>>, vector<8x128xf32>,
      %c64_i32 = arith.constant 64 : i32
      %22 = arith.muli %arg1, %c64_i32 : i32
      %23 = tpu.assume_multiple %22, 64 : i32
      %24 = arith.index_cast %23 : i32 to index
      %c0_17 = arith.constant 0 : index
      %25 = vector.load %arg8[%24, %c0_17] : memref<256x128xf32, #tpu.memory_space<vmem>>, vector<64x128xf32>
      tpu.vector_store %arg8[%24, %c0_17], %11 {strides = array<i32>} : memref<256x128xf32, #tpu.memory_space<vmem>>, vector<64x128xf32>,
    } else {
    }
    %c1_i32 = arith.constant 1 : i32
    %3 = arith.cmpi eq, %arg0, %c1_i32 : i32
    %4 = arith.extui %3 : i1 to i32
    %c0_i32_1 = arith.constant 0 : i32
    %5 = arith.cmpi ne, %4, %c0_i32_1 : i32
    scf.if %5 {
      %c0_i32_2 = arith.constant 0 : i32
      %6 = arith.cmpi eq, %arg1, %c0_i32_2 : i32
      %7 = arith.extui %6 : i1 to i32
      %c0_i32_3 = arith.constant 0 : i32
      %8 = arith.cmpi ne, %7, %c0_i32_3 : i32
      scf.if %8 {
        %c0_14 = arith.constant 0 : index
        %c0_15 = arith.constant 0 : index
        %27 = vector.load %arg9[%c0_14, %c0_15] : memref<8x128xf32, #tpu.memory_space<vmem>>, vector<8x128xf32>
        %cst_16 = arith.constant dense<0.000000e+00> : vector<128xf32>
        %28 = vector.multi_reduction <add>, %27, %cst_16 [0] : vector<8x128xf32> to vector<128xf32>
        %29 = vector.shape_cast %28 : vector<128xf32> to vector<1x128xf32>
        %c0_17 = arith.constant 0 : index
        %c0_18 = arith.constant 0 : index
        %30 = vector.load %arg10[%c0_17, %c0_18] : memref<8x128xf32, #tpu.memory_space<vmem>>, vector<8x128xf32>
        %cst_19 = arith.constant dense<0.000000e+00> : vector<128xf32>
        %31 = vector.multi_reduction <add>, %30, %cst_19 [0] : vector<8x128xf32> to vector<128xf32>
        %32 = vector.shape_cast %31 : vector<128xf32> to vector<1x128xf32>
        %cst_20 = arith.constant 3.906250e-03 : f32
        %33 = vector.broadcast %cst_20 : f32 to vector<1x128xf32>
        %34 = arith.mulf %29, %33 : vector<1x128xf32>
        %cst_21 = arith.constant 3.906250e-03 : f32
        %35 = vector.broadcast %cst_21 : f32 to vector<1x128xf32>
        %36 = arith.mulf %32, %35 : vector<1x128xf32>
        %37 = arith.mulf %34, %34 : vector<1x128xf32>
        %38 = arith.subf %36, %37 : vector<1x128xf32>
        %cst_22 = arith.constant 0.000000e+00 : f32
        %39 = vector.broadcast %cst_22 : f32 to vector<1x128xf32>
        %40 = arith.maximumf %38, %39 : vector<1x128xf32>
        %c0_23 = arith.constant 0 : index
        %c0_24 = arith.constant 0 : index
        %41 = vector.load %arg4[%c0_23, %c0_24] : memref<2x128xf32, #tpu.memory_space<vmem>>, vector<1x128xf32>
        %cst_25 = arith.constant 9.99999974E-6 : f32
        %42 = vector.broadcast %cst_25 : f32 to vector<1x128xf32>
        %43 = arith.addf %40, %42 : vector<1x128xf32>
        %44 = math.rsqrt %43 : vector<1x128xf32>
        %45 = arith.mulf %41, %44 : vector<1x128xf32>
        %c0_26 = arith.constant 0 : index
        %c0_27 = arith.constant 0 : index
        %46 = vector.load %arg11[%c0_26, %c0_27] : memref<2x128xf32, #tpu.memory_space<vmem>>, vector<1x128xf32>
        tpu.vector_store %arg11[%c0_26, %c0_27], %45 {strides = array<i32>} : memref<2x128xf32, #tpu.memory_space<vmem>>, vector<1x128xf32>,
        %c1_28 = arith.constant 1 : index
        %c0_29 = arith.constant 0 : index
        %47 = vector.load %arg4[%c1_28, %c0_29] : memref<2x128xf32, #tpu.memory_space<vmem>>, vector<1x128xf32>
        %48 = arith.mulf %34, %45 : vector<1x128xf32>
        %49 = arith.subf %47, %48 : vector<1x128xf32>
        %c1_30 = arith.constant 1 : index
        %c0_31 = arith.constant 0 : index
        %50 = vector.load %arg11[%c1_30, %c0_31] : memref<2x128xf32, #tpu.memory_space<vmem>>, vector<1x128xf32>
        tpu.vector_store %arg11[%c1_30, %c0_31], %49 {strides = array<i32>} : memref<2x128xf32, #tpu.memory_space<vmem>>, vector<1x128xf32>,
      } else {
      }
      %c64_i32 = arith.constant 64 : i32
      %9 = arith.muli %arg1, %c64_i32 : i32
      %10 = tpu.assume_multiple %9, 64 : i32
      %11 = arith.index_cast %10 : i32 to index
      %c0 = arith.constant 0 : index
      %12 = vector.load %arg8[%11, %c0] : memref<256x128xf32, #tpu.memory_space<vmem>>, vector<64x128xf32>
      %c0_4 = arith.constant 0 : index
      %c0_5 = arith.constant 0 : index
      %13 = vector.load %arg11[%c0_4, %c0_5] : memref<2x128xf32, #tpu.memory_space<vmem>>, vector<1x128xf32>
      %14 = vector.broadcast %13 : vector<1x128xf32> to vector<64x128xf32>
      %15 = arith.mulf %12, %14 : vector<64x128xf32>
      %c1 = arith.constant 1 : index
      %c0_6 = arith.constant 0 : index
      %16 = vector.load %arg11[%c1, %c0_6] : memref<2x128xf32, #tpu.memory_space<vmem>>, vector<1x128xf32>
      %17 = vector.broadcast %16 : vector<1x128xf32> to vector<64x128xf32>
      %18 = arith.addf %15, %17 : vector<64x128xf32>
      %cst = arith.constant 0.000000e+00 : f32
      %19 = vector.broadcast %cst : f32 to vector<64x128xf32>
      %20 = arith.maximumf %18, %19 : vector<64x128xf32>
      %c0_7 = arith.constant 0 : index
      %c0_8 = arith.constant 0 : index
      %21 = vector.load %arg5[%c0_7, %c0_8] : memref<128x256xf32, #tpu.memory_space<vmem>>, vector<128x256xf32>
      %cst_9 = arith.constant dense<0.000000e+00> : vector<64x256xf32>
      %22 = tpu.matmul %20, %21, %cst_9 {dimension_numbers = #tpu.dot_dimension_numbers<[1], [0], [0], [1], [0, 0, 1, 1], [], []>} : vector<64x128xf32>, vector<128x256xf32>, vector<64x256xf32> -> vector<64x256xf32>
      %c0_10 = arith.constant 0 : index
      %c0_11 = arith.constant 0 : index
      %23 = vector.load %arg6[%c0_10, %c0_11] : memref<1x256xf32, #tpu.memory_space<vmem>>, vector<1x256xf32>
      %24 = vector.broadcast %23 : vector<1x256xf32> to vector<64x256xf32>
      %25 = arith.addf %22, %24 : vector<64x256xf32>
      %c0_12 = arith.constant 0 : index
      %c0_13 = arith.constant 0 : index
      %26 = vector.load %arg7[%c0_12, %c0_13] : memref<64x256xf32, #tpu.memory_space<vmem>>, vector<64x256xf32>
      tpu.vector_store %arg7[%c0_12, %c0_13], %25 {strides = array<i32>} : memref<64x256xf32, #tpu.memory_space<vmem>>, vector<64x256xf32>,
    } else {
    }
    return
  }
  func.func @transform_0(%arg0: i32, %arg1: i32) -> (i32, i32) {
    %c1_i32 = arith.constant 1 : i32
    %0 = arith.subi %c1_i32, %arg0 : i32
    %1 = arith.muli %arg1, %0 : i32
    %c3_i32 = arith.constant 3 : i32
    %2 = arith.muli %arg0, %c3_i32 : i32
    %3 = arith.addi %1, %2 : i32
    %c0_i32 = arith.constant 0 : i32
    %c0_i32_0 = arith.constant 0 : i32
    return %3, %c0_i32 : i32, i32
  }
  func.func @transform_1(%arg0: i32, %arg1: i32) -> (i32, i32) {
    %c0_i32 = arith.constant 0 : i32
    %c0_i32_0 = arith.constant 0 : i32
    %c0_i32_1 = arith.constant 0 : i32
    return %c0_i32, %c0_i32_0 : i32, i32
  }
  func.func @transform_2(%arg0: i32, %arg1: i32) -> (i32, i32) {
    %c0_i32 = arith.constant 0 : i32
    %c0_i32_0 = arith.constant 0 : i32
    %c0_i32_1 = arith.constant 0 : i32
    return %c0_i32, %c0_i32_0 : i32, i32
  }
  func.func @transform_3(%arg0: i32, %arg1: i32) -> (i32, i32) {
    %c0_i32 = arith.constant 0 : i32
    %c0_i32_0 = arith.constant 0 : i32
    %c0_i32_1 = arith.constant 0 : i32
    return %c0_i32, %c0_i32_0 : i32, i32
  }
  func.func @transform_4(%arg0: i32, %arg1: i32) -> (i32, i32) {
    %c0_i32 = arith.constant 0 : i32
    %c0_i32_0 = arith.constant 0 : i32
    %c0_i32_1 = arith.constant 0 : i32
    return %c0_i32, %c0_i32_0 : i32, i32
  }
  func.func @transform_5(%arg0: i32, %arg1: i32) -> (i32, i32) {
    %0 = arith.muli %arg1, %arg0 : i32
    %c0_i32 = arith.constant 0 : i32
    %c0_i32_0 = arith.constant 0 : i32
    return %0, %c0_i32 : i32, i32
  }
}

</mosaic_0001>

<llo_original>
// kernel: tpu_custom_call.1
$region0: #{tpu_custom_call.1}
  #allocation0 [shape = 'u32[]', space=smem, size = 0x4, offset = 0x4, fixed_abs, tag = 'smem constant byte address 0x4 - core index']
  #allocation1 [shape = 'u32[144,128]{1,0:T(1,128)}', space=vmem, size = 0x12000, scoped, tag = 'internal scratch']
  #allocation2 [shape = 'f32[256,128]{1,0:T(8,128)}', space=vmem, size = 0x20000, scoped, tag = 'scratch operand']
  #allocation3 [shape = 'f32[8,128]{1,0:T(8,128)}', space=vmem, size = 0x1000, scoped, tag = 'scratch operand']
  #allocation4 [shape = 'f32[8,128]{1,0:T(8,128)}', space=vmem, size = 0x1000, scoped, tag = 'scratch operand']
  #allocation5 [shape = 'f32[2,128]{1,0:T(2,128)}', space=vmem, size = 0x400, scoped, tag = 'scratch operand']
  %s0 = inlined_call_operand.hbm [shape: f32[256,256], index: 0, kind: input, shape index: {}]
  %s1 = inlined_call_operand.hbm [shape: f32[256,128], index: 1, kind: input, shape index: {}]
  %s2 = inlined_call_operand.vmem [shape: f32[2,128], index: 2, kind: input, shape index: {}]
  %s3 = inlined_call_operand.hbm [shape: f32[128,256], index: 3, kind: input, shape index: {}]
  %s4 = inlined_call_operand.vmem [shape: f32[1,256], index: 4, kind: input, shape index: {}]
  %s5 = inlined_call_operand.hbm [shape: f32[256,256], index: 5, kind: output, shape index: {}]
  %s6 = sld [smem:[#allocation0]]
  $region81: #{tpu_custom_call.1} parent=0
    _
  %s8 = ssub.s32 1, %s6
  %s9 = scalar_select 0, %s8, %s6
  $region1: #{tpu_custom_call.1} parent=0
    #allocation6 [shape = 'u8[131072]{0}', space=vmem, size = 0x20000, scoped, tag = 'input window, operand 0']
    #allocation7 [shape = 's32[2]{0}', space=sflag, size = 0x8, scoped, tag = 'scoped memory for tpu_custom_call.1']
    #allocation8 [shape = 's32[2]{0}', space=sflag, size = 0x8, scoped, tag = 'scoped memory for tpu_custom_call.1']
    #allocation9 [shape = 'u8[131072]{0}', space=vmem, size = 0x20000, scoped, tag = 'input window, operand 1, single buffered']
    #allocation10 [shape = 's32[1]{0}', space=sflag, size = 0x4, scoped, tag = 'scoped memory for tpu_custom_call.1']
    #allocation11 [shape = 'u8[131072]{0}', space=vmem, size = 0x20000, scoped, tag = 'input window, operand 3, single buffered']
    #allocation12 [shape = 'u8[131072]{0}', space=vmem, size = 0x20000, scoped, tag = 'output window, operand 0']
    %10 = vsyncpa [#allocation7], 0
    %s11 = scalar_lea.sflag [#allocation7], 1
    %12 = vsyncpa %s11, 0
    %13 = vsyncpa [#allocation10], 0
    %14 = vsyncpa [#allocation8], 0
    %s15 = scalar_lea.sflag [#allocation8], 1
    %16 = vsyncpa %s15, 0
    loop: start=0, step=1, limit=10
    $region2: #{tpu_custom_call.1} parent=1 // loop_pre_header
      _
    $region3: #{tpu_custom_call.1} parent=1 // loop_header
      %s18 = sphi 0, %s22
      %p19 = scmp.ge.s32.totalorder %s18, 10
      %s25 = sphi 0, %s37
      %s26 = sphi 0, %s33
      %s27 = sphi 0, %s25
      %s28 = sphi 0, %s26
      %s29 = sphi 0, %s27
      %s30 = sphi 0, %s28
      %s48 = sphi 0, %s50
      %s51 = sphi 0, %s48
      %s52 = sphi 0, %s51
      %s68 = sphi 0, %s52
      %s72 = sphi 0, %s72
      %s74 = sphi 0, %s72
      %s75 = sphi 0, %s74
      %s89 = sphi 0, %s75
      %s93 = sphi 0, %s93
      %s95 = sphi 0, %s93
      %s96 = sphi 0, %s95
      %s110 = sphi 0, %s96
      %s114 = sphi 0, %s114
      %s116 = sphi 0, %s114
      %s117 = sphi 0, %s116
      %s131 = sphi 0, %s117
      %s135 = sphi 0, %s135
      %s137 = sphi 0, %s135
      %s138 = sphi 0, %s137
      %s152 = sphi 0, %s138
      %s160 = sphi 0, %s162
      %s163 = sphi 0, %s160
      %s164 = sphi 0, %s163
      %s180 = sphi 0, %s164
    $region4: #{tpu_custom_call.1} parent=1 // loop_header_branch
      %21 = sbr.rel (%p19) target = $region8
    $region5: #{tpu_custom_call.1} parent=1 // loop_body
      %s23 = ssub.s32 %s18, 1
      %s24 = ssub.s32 %s18, 2
      %s31 = sadd.s32 1, %s26
      %p32 = scmp.ge.s32.totalorder %s31, 4
      %s33 = scalar_select %p32, 0, %s31
      %s34 = sadd.s32 1, %s25
      %s35 = scalar_select %p32, %s34, %s25
      %p36 = scmp.ge.s32.totalorder %s35, 2
      %s37 = scalar_select %p36, 0, %s35
      %s38 = ssub.s32 1, %s25
      %s39 = smul.u32 %s26, %s38
      %s40 = smul.u32 %s25, 3
      %s41 = sadd.s32 %s39, %s40
      %s42 = ssub.s32 1, %s37
      %s43 = smul.u32 %s33, %s42
      %s44 = smul.u32 %s37, 3
      %s45 = sadd.s32 %s43, %s44
      %s46 = ssub.s32 %s41, %s45
      %p47 = scmp.eq.s32.totalorder %s46, 0
      %s49 = sadd.s32 %s48, 1
      %s50 = scalar_select %p47, %s48, %s49
      %p53 = pneg %p47
      %p54 = scmp.eq.s32.totalorder %s18, 7
      %p55 = por %p53, %p54
      %p56 = scmp.ne.s32.totalorder %s48, %s51
      %p57 = scmp.eq.s32.totalorder %s18, 0
      %p58 = por %p56, %p57
      %p59 = scmp.ne.s32.totalorder %s48, %s51
      %p60 = scmp.eq.s32.totalorder %s23, 7
      %p61 = por %p59, %p60
      %p62 = scmp.ne.s32.totalorder %s51, %s52
      %p63 = scmp.eq.s32.totalorder %s23, 0
      %p64 = por %p62, %p63
      %p65 = scmp.ne.s32.totalorder %s51, %s52
      %p66 = scmp.eq.s32.totalorder %s24, 7
      %p67 = por %p65, %p66
      %p69 = scmp.ne.s32.totalorder %s52, %s68
      %p70 = scmp.eq.s32.totalorder %s24, 0
      %p71 = por %p69, %p70
      %s73 = sadd.s32 %s72, 1
      %p76 = scmp.eq.s32.totalorder %s18, 7
      %p77 = scmp.ne.s32.totalorder %s72, %s74
      %p78 = scmp.eq.s32.totalorder %s18, 0
      %p79 = por %p77, %p78
      %p80 = scmp.ne.s32.totalorder %s72, %s74
      %p81 = scmp.eq.s32.totalorder %s23, 7
      %p82 = por %p80, %p81
      %p83 = scmp.ne.s32.totalorder %s74, %s75
      %p84 = scmp.eq.s32.totalorder %s23, 0
      %p85 = por %p83, %p84
      %p86 = scmp.ne.s32.totalorder %s74, %s75
      %p87 = scmp.eq.s32.totalorder %s24, 7
      %p88 = por %p86, %p87
      %p90 = scmp.ne.s32.totalorder %s75, %s89
      %p91 = scmp.eq.s32.totalorder %s24, 0
      %p92 = por %p90, %p91
      %s94 = sadd.s32 %s93, 1
      %p97 = scmp.eq.s32.totalorder %s18, 7
      %p98 = scmp.ne.s32.totalorder %s93, %s95
      %p99 = scmp.eq.s32.totalorder %s18, 0
      %p100 = por %p98, %p99
      %p101 = scmp.ne.s32.totalorder %s93, %s95
      %p102 = scmp.eq.s32.totalorder %s23, 7
      %p103 = por %p101, %p102
      %p104 = scmp.ne.s32.totalorder %s95, %s96
      %p105 = scmp.eq.s32.totalorder %s23, 0
      %p106 = por %p104, %p105
      %p107 = scmp.ne.s32.totalorder %s95, %s96
      %p108 = scmp.eq.s32.totalorder %s24, 7
      %p109 = por %p107, %p108
      %p111 = scmp.ne.s32.totalorder %s96, %s110
      %p112 = scmp.eq.s32.totalorder %s24, 0
      %p113 = por %p111, %p112
      %s115 = sadd.s32 %s114, 1
      %p118 = scmp.eq.s32.totalorder %s18, 7
      %p119 = scmp.ne.s32.totalorder %s114, %s116
      %p120 = scmp.eq.s32.totalorder %s18, 0
      %p121 = por %p119, %p120
      %p122 = scmp.ne.s32.totalorder %s114, %s116
      %p123 = scmp.eq.s32.totalorder %s23, 7
      %p124 = por %p122, %p123
      %p125 = scmp.ne.s32.totalorder %s116, %s117
      %p126 = scmp.eq.s32.totalorder %s23, 0
      %p127 = por %p125, %p126
      %p128 = scmp.ne.s32.totalorder %s116, %s117
      %p129 = scmp.eq.s32.totalorder %s24, 7
      %p130 = por %p128, %p129
      %p132 = scmp.ne.s32.totalorder %s117, %s131
      %p133 = scmp.eq.s32.totalorder %s24, 0
      %p134 = por %p132, %p133
      %s136 = sadd.s32 %s135, 1
      %p139 = scmp.eq.s32.totalorder %s18, 7
      %p140 = scmp.ne.s32.totalorder %s135, %s137
      %p141 = scmp.eq.s32.totalorder %s18, 0
      %p142 = por %p140, %p141
      %p143 = scmp.ne.s32.totalorder %s135, %s137
      %p144 = scmp.eq.s32.totalorder %s23, 7
      %p145 = por %p143, %p144
      %p146 = scmp.ne.s32.totalorder %s137, %s138
      %p147 = scmp.eq.s32.totalorder %s23, 0
      %p148 = por %p146, %p147
      %p149 = scmp.ne.s32.totalorder %s137, %s138
      %p150 = scmp.eq.s32.totalorder %s24, 7
      %p151 = por %p149, %p150
      %p153 = scmp.ne.s32.totalorder %s138, %s152
      %p154 = scmp.eq.s32.totalorder %s24, 0
      %p155 = por %p153, %p154
      %s156 = smul.u32 %s26, %s25
      %s157 = smul.u32 %s33, %s37
      %s158 = ssub.s32 %s156, %s157
      %p159 = scmp.eq.s32.totalorder %s158, 0
      %s161 = sadd.s32 %s160, 1
      %s162 = scalar_select %p159, %s160, %s161
      %p165 = pneg %p159
      %p166 = scmp.eq.s32.totalorder %s18, 7
      %p167 = por %p165, %p166
      %p168 = scmp.ne.s32.totalorder %s160, %s163
      %p169 = scmp.eq.s32.totalorder %s18, 0
      %p170 = por %p168, %p169
      %p171 = scmp.ne.s32.totalorder %s160, %s163
      %p172 = scmp.eq.s32.totalorder %s23, 7
      %p173 = por %p171, %p172
      %p174 = scmp.ne.s32.totalorder %s163, %s164
      %p175 = scmp.eq.s32.totalorder %s23, 0
      %p176 = por %p174, %p175
      %p177 = scmp.ne.s32.totalorder %s163, %s164
      %p178 = scmp.eq.s32.totalorder %s24, 7
      %p179 = por %p177, %p178
      %p181 = scmp.ne.s32.totalorder %s164, %s180
      %p182 = scmp.eq.s32.totalorder %s24, 0
      %p183 = por %p181, %p182
      %p184 = scmp.le.s32.totalorder 1, %s18
      %p185 = scmp.lt.s32.totalorder %s18, 9
      %p186 = pnand %p184, %p185
      %p187 = pneg %p186
      // Predicated region
      $region9: #{tpu_custom_call.1} parent=5 // pred_check
        _
      $region10: #{tpu_custom_call.1} parent=5 // pred_check_branch
        %189 = sbr.rel (%p186) target = $region12
      $region11: #{tpu_custom_call.1} parent=5 // pred_region
        %s190 = ssub.s32 %s18, 1
        // Predicated region
        $region13: #{tpu_custom_call.1} parent=11 // pred_check
          %p191 = pneg %p85
        $region14: #{tpu_custom_call.1} parent=11 // pred_check_branch
          %193 = sbr.rel (%p191) target = $region16
        $region15: #{tpu_custom_call.1} parent=11 // pred_region
          %s195 = ssub.s32 4096, 4096
          %196 = vsyncadd [#allocation10], %s195
          %s197 = sshll.u32 [#allocation9], 4
          %s198 = int_to_ptr.vmem [resolvable:$true] %s197
          %203 = dma.hbm_to_vmem [thread:$0]  %s1, 4096, %s198, [#allocation10], 128, 128, 8
        $region16: #{tpu_custom_call.1} parent=11 // pred_fallthru
          _
        // Predicated region
        $region17: #{tpu_custom_call.1} parent=11 // pred_check
          %p204 = pneg %p106
        $region18: #{tpu_custom_call.1} parent=11 // pred_check_branch
          %206 = sbr.rel (%p204) target = $region20
        $region19: #{tpu_custom_call.1} parent=11 // pred_region
          _
        $region20: #{tpu_custom_call.1} parent=11 // pred_fallthru
          _
        // Predicated region
        $region21: #{tpu_custom_call.1} parent=11 // pred_check
          %p207 = pneg %p127
        $region22: #{tpu_custom_call.1} parent=11 // pred_check_branch
          %209 = sbr.rel (%p207) target = $region24
        $region23: #{tpu_custom_call.1} parent=11 // pred_region
          %s211 = ssub.s32 4096, 4096
          %212 = vsyncadd [#allocation10], %s211
          %s213 = sshll.u32 [#allocation11], 4
          %s214 = int_to_ptr.vmem [resolvable:$true] %s213
          %219 = dma.hbm_to_vmem [thread:$0]  %s3, 4096, %s214, [#allocation10], 256, 256, 16
        $region24: #{tpu_custom_call.1} parent=11 // pred_fallthru
          _
        // Predicated region
        $region25: #{tpu_custom_call.1} parent=11 // pred_check
          %p220 = pneg %p148
        $region26: #{tpu_custom_call.1} parent=11 // pred_check_branch
          %222 = sbr.rel (%p220) target = $region28
        $region27: #{tpu_custom_call.1} parent=11 // pred_region
          _
        $region28: #{tpu_custom_call.1} parent=11 // pred_fallthru
          _
      $region12: #{tpu_custom_call.1} parent=5 // pred_fallthru
        _
      %p223 = scmp.lt.s32.totalorder %s18, 8
      // Predicated region
      $region29: #{tpu_custom_call.1} parent=5 // pred_check
        %p224 = pneg %p223
      $region30: #{tpu_custom_call.1} parent=5 // pred_check_branch
        %226 = sbr.rel (%p224) target = $region32
      $region31: #{tpu_custom_call.1} parent=5 // pred_region
        // Predicated region
        $region33: #{tpu_custom_call.1} parent=31 // pred_check
          %p227 = pneg %p58
        $region34: #{tpu_custom_call.1} parent=31 // pred_check_branch
          %229 = sbr.rel (%p227) target = $region36
        $region35: #{tpu_custom_call.1} parent=31 // pred_region
          %s230 = sand.u32 %s48, 1
          %s231 = scalar_lea.sflag [#allocation7], %s230
          %s232 = sand.u32 %s48, 1
          %s233 = smul.addr %s232, 128
          %s234 = scalar_lea.vmem [#allocation6], %s233
          %s235 = ssub.s32 1, %s25
          %s236 = smul.u32 %s26, %s235
          %s237 = smul.u32 %s25, 3
          %s238 = sadd.s32 %s236, %s237
          %s239 = smul.u32 8, %s238
          %s241 = ssub.s32 2048, 2048
          %242 = vsyncadd %s231, %s241
          %s243 = smul.addr %s239, 2
          %s244 = smul.addr %s243, 128
          %s245 = scalar_lea.hbm %s0, %s244
          %s246 = sshll.u32 %s234, 4
          %s247 = int_to_ptr.vmem [resolvable:$true] %s246
          %252 = dma.hbm_to_vmem [thread:$0]  %s245, 2048, %s247, %s231, 256, 256, 16
        $region36: #{tpu_custom_call.1} parent=31 // pred_fallthru
          _
      $region32: #{tpu_custom_call.1} parent=5 // pred_fallthru
        _
      %p253 = scmp.le.s32.totalorder 1, %s18
      %p254 = scmp.lt.s32.totalorder %s18, 9
      %p255 = pnand %p253, %p254
      %p256 = pneg %p255
      // Predicated region
      $region37: #{tpu_custom_call.1} parent=5 // pred_check
        _
      $region38: #{tpu_custom_call.1} parent=5 // pred_check_branch
        %258 = sbr.rel (%p255) target = $region40
      $region39: #{tpu_custom_call.1} parent=5 // pred_region
        %s259 = ssub.s32 %s18, 1
        %s260 = sand.u32 %s51, 1
        %s261 = scalar_lea.sflag [#allocation7], %s260
        %s262 = sand.u32 %s51, 1
        %s263 = smul.addr %s262, 128
        %s264 = scalar_lea.vmem [#allocation6], %s263
        // Predicated region
        $region41: #{tpu_custom_call.1} parent=39 // pred_check
          %p265 = pneg %p64
        $region42: #{tpu_custom_call.1} parent=39 // pred_check_branch
          %267 = sbr.rel (%p265) target = $region44
        $region43: #{tpu_custom_call.1} parent=39 // pred_region
          %268 = dma.done %s261, 2048
        $region44: #{tpu_custom_call.1} parent=39 // pred_fallthru
          _
        // Predicated region
        $region45: #{tpu_custom_call.1} parent=39 // pred_check
          %p269 = pneg %p85
        $region46: #{tpu_custom_call.1} parent=39 // pred_check_branch
          %271 = sbr.rel (%p269) target = $region48
        $region47: #{tpu_custom_call.1} parent=39 // pred_region
          %272 = dma.done [#allocation10], 4096
        $region48: #{tpu_custom_call.1} parent=39 // pred_fallthru
          _
        // Predicated region
        $region49: #{tpu_custom_call.1} parent=39 // pred_check
          %p273 = pneg %p127
        $region50: #{tpu_custom_call.1} parent=39 // pred_check_branch
          %275 = sbr.rel (%p273) target = $region52
        $region51: #{tpu_custom_call.1} parent=39 // pred_region
          %276 = dma.done [#allocation10], 4096
        $region52: #{tpu_custom_call.1} parent=39 // pred_fallthru
          _
        %s277 = sand.u32 %s51, 1
        %s278 = scalar_lea.sflag [#allocation7], %s277
        %s279 = sand.u32 %s51, 1
        %s280 = smul.addr %s279, 128
        %s281 = scalar_lea.vmem [#allocation6], %s280
        %p282 = pneg %p64
        %p283 = pneg %p61
        %p284 = pneg %p85
        %p285 = pneg %p82
        %p286 = pneg %p106
        %p287 = pneg %p103
        %p288 = pneg %p127
        %p289 = pneg %p124
        %p290 = pneg %p148
        %p291 = pneg %p145
        %p292 = pneg %p176
        %p293 = pneg %p173
        %s294 = sand.u32 %s163, 1
        %s295 = scalar_lea.sflag [#allocation8], %s294
        %s296 = sand.u32 %s163, 1
        %s297 = smul.addr %s296, 128
        %s298 = scalar_lea.vmem [#allocation12], %s297
        %s299 = ssub.s32 1, %s27
        %s300 = smul.u32 %s28, %s299
        %s301 = smul.u32 %s27, 3
        %s302 = sadd.s32 %s300, %s301
        %s303 = smul.u32 8, %s302
        %s304 = smul.u32 %s28, %s27
        %s305 = smul.u32 8, %s304
        %p306 = scmp.eq.s32.totalorder %s27, 0
        // Predicated region
        $region53: #{tpu_custom_call.1} parent=39 // pred_check
          %p307 = pneg %p306
        $region54: #{tpu_custom_call.1} parent=39 // pred_check_branch
          %309 = sbr.rel (%p307) target = $region56
        $region55: #{tpu_custom_call.1} parent=39 // pred_region
          %p310 = scmp.eq.s32.totalorder %s28, 0
          // Predicated region
          $region57: #{tpu_custom_call.1} parent=55 // pred_check
            %p311 = pneg %p310
          $region58: #{tpu_custom_call.1} parent=55 // pred_check_branch
            %313 = sbr.rel (%p311) target = $region60
          $region59: #{tpu_custom_call.1} parent=55 // pred_region
            %314 = vst [vmem:[#allocation3] sm:$0xff] 0.0
            %315 = vst [vmem:[#allocation4] sm:$0xff] 0.0
          $region60: #{tpu_custom_call.1} parent=55 // pred_fallthru
            _
          %v316 = vld [vmem:[%s264] sm:$0xff]
          %v317 = vld [vmem:[%s264 + $0x8] sm:$0xff]
          %v318 = vld [vmem:[%s264 + $0x10] sm:$0xff]
          %v319 = vld [vmem:[%s264 + $0x18] sm:$0xff]
          %v320 = vld [vmem:[%s264 + $0x20] sm:$0xff]
          %v321 = vld [vmem:[%s264 + $0x28] sm:$0xff]
          %v322 = vld [vmem:[%s264 + $0x30] sm:$0xff]
          %v323 = vld [vmem:[%s264 + $0x38] sm:$0xff]
          %v324 = vld [vmem:[%s264 + $0x40] sm:$0xff]
          %v325 = vld [vmem:[%s264 + $0x48] sm:$0xff]
          %v326 = vld [vmem:[%s264 + $0x50] sm:$0xff]
          %v327 = vld [vmem:[%s264 + $0x58] sm:$0xff]
          %v328 = vld [vmem:[%s264 + $0x60] sm:$0xff]
          %v329 = vld [vmem:[%s264 + $0x68] sm:$0xff]
          %v330 = vld [vmem:[%s264 + $0x70] sm:$0xff]
          %v331 = vld [vmem:[%s264 + $0x78] sm:$0xff]
          %v332 = vld [vmem:[#allocation9] sm:$0xff]
          %v333 = vld [vmem:[#allocation9 + $0x8] sm:$0xff]
          %v334 = vld [vmem:[#allocation9 + $0x10] sm:$0xff]
          %v335 = vld [vmem:[#allocation9 + $0x18] sm:$0xff]
          %v336 = vld [vmem:[#allocation9 + $0x20] sm:$0xff]
          %v337 = vld [vmem:[#allocation9 + $0x28] sm:$0xff]
          %v338 = vld [vmem:[#allocation9 + $0x30] sm:$0xff]
          %v339 = vld [vmem:[#allocation9 + $0x38] sm:$0xff]
          %v340 = vld [vmem:[#allocation9 + $0x40] sm:$0xff]
          %v341 = vld [vmem:[#allocation9 + $0x48] sm:$0xff]
          %v342 = vld [vmem:[#allocation9 + $0x50] sm:$0xff]
          %v343 = vld [vmem:[#allocation9 + $0x58] sm:$0xff]
          %v344 = vld [vmem:[#allocation9 + $0x60] sm:$0xff]
          %v345 = vld [vmem:[#allocation9 + $0x68] sm:$0xff]
          %v346 = vld [vmem:[#allocation9 + $0x70] sm:$0xff]
          %v347 = vld [vmem:[#allocation9 + $0x78] sm:$0xff]
          %v348 = vld [vmem:[#allocation9 + $0x80] sm:$0xff]
          %v349 = vld [vmem:[#allocation9 + $0x88] sm:$0xff]
          %v350 = vld [vmem:[#allocation9 + $0x90] sm:$0xff]
          %v351 = vld [vmem:[#allocation9 + $0x98] sm:$0xff]
          %v352 = vld [vmem:[#allocation9 + $0xa0] sm:$0xff]
          %v353 = vld [vmem:[#allocation9 + $0xa8] sm:$0xff]
          %v354 = vld [vmem:[#allocation9 + $0xb0] sm:$0xff]
          %v355 = vld [vmem:[#allocation9 + $0xb8] sm:$0xff]
          %v356 = vld [vmem:[#allocation9 + $0xc0] sm:$0xff]
          %v357 = vld [vmem:[#allocation9 + $0xc8] sm:$0xff]
          %v358 = vld [vmem:[#allocation9 + $0xd0] sm:$0xff]
          %v359 = vld [vmem:[#allocation9 + $0xd8] sm:$0xff]
          %v360 = vld [vmem:[#allocation9 + $0xe0] sm:$0xff]
          %v361 = vld [vmem:[#allocation9 + $0xe8] sm:$0xff]
          %v362 = vld [vmem:[#allocation9 + $0xf0] sm:$0xff]
          %v363 = vld [vmem:[#allocation9 + $0xf8] sm:$0xff]
          %364 = vmatprep.subr.mxu0 0.0
          %365 = vmatpush1.msra.mxu0 %v347
          %366 = vmatprep.subr.mxu0 0.0
          %367 = vmatpush1.msra.mxu0 %v346
          %368 = vmatprep.subr.mxu0 0.0
          %369 = vmatpush1.msra.mxu0 %v345
          %370 = vmatprep.subr.mxu0 0.0
          %371 = vmatpush1.msra.mxu0 %v344
          %372 = vmatprep.subr.mxu0 0.0
          %373 = vmatpush1.msra.mxu0 %v343
          %374 = vmatprep.subr.mxu0 0.0
          %375 = vmatpush1.msra.mxu0 %v342
          %376 = vmatprep.subr.mxu0 0.0
          %377 = vmatpush1.msra.mxu0 %v341
          %378 = vmatprep.subr.mxu0 0.0
          %379 = vmatpush1.msra.mxu0 %v340
          %380 = vmatprep.subr.mxu0 0.0
          %381 = vmatpush1.msra.mxu0 %v339
          %382 = vmatprep.subr.mxu0 0.0
          %383 = vmatpush1.msra.mxu0 %v338
          %384 = vmatprep.subr.mxu0 0.0
          %385 = vmatpush1.msra.mxu0 %v337
          %386 = vmatprep.subr.mxu0 0.0
          %387 = vmatpush1.msra.mxu0 %v336
          %388 = vmatprep.subr.mxu0 0.0
          %389 = vmatpush1.msra.mxu0 %v335
          %390 = vmatprep.subr.mxu0 0.0
          %391 = vmatpush1.msra.mxu0 %v334
          %392 = vmatprep.subr.mxu0 0.0
          %393 = vmatpush1.msra.mxu0 %v333
          %394 = vmatprep.subr.mxu0 0.0
          %395 = vmatpush1.msra.mxu0 %v332
          %396 = vmatprep.subr.mxu0 0.0
          %397 = vmatpush2.msra.mxu0 %v363
          %398 = vmatprep.subr.mxu0 0.0
          %399 = vmatpush2.msra.mxu0 %v362
          %400 = vmatprep.subr.mxu0 0.0
          %401 = vmatpush2.msra.mxu0 %v361
          %402 = vmatprep.subr.mxu0 0.0
          %403 = vmatpush2.msra.mxu0 %v360
          %404 = vmatprep.subr.mxu0 0.0
          %405 = vmatpush2.msra.mxu0 %v359
          %406 = vmatprep.subr.mxu0 0.0
          %407 = vmatpush2.msra.mxu0 %v358
          %408 = vmatprep.subr.mxu0 0.0
          %409 = vmatpush2.msra.mxu0 %v357
          %410 = vmatprep.subr.mxu0 0.0
          %411 = vmatpush2.msra.mxu0 %v356
          %412 = vmatprep.subr.mxu0 0.0
          %413 = vmatpush2.msra.mxu0 %v355
          %414 = vmatprep.subr.mxu0 0.0
          %415 = vmatpush2.msra.mxu0 %v354
          %416 = vmatprep.subr.mxu0 0.0
          %417 = vmatpush2.msra.mxu0 %v353
          %418 = vmatprep.subr.mxu0 0.0
          %419 = vmatpush2.msra.mxu0 %v352
          %420 = vmatprep.subr.mxu0 0.0
          %421 = vmatpush2.msra.mxu0 %v351
          %422 = vmatprep.subr.mxu0 0.0
          %423 = vmatpush2.msra.mxu0 %v350
          %424 = vmatprep.subr.mxu0 0.0
          %425 = vmatpush2.msra.mxu0 %v349
          %426 = vmatprep.subr.mxu0 0.0
          %427 = vmatpush2.msra.mxu0 %v348
          %428 = vmatprep.mubr.f32.mxu0 %v317
          %429 = vmatmul.mubr.f32.gmra.mxu0 %v316
          %v430 = vpop.f32.mrf.mxu0
          %v431 = vadd.f32 0.0, %v430
          %v432 = vpop.f32.mrf.mxu0
          %433 = vmatprep.mubr.f32.mxu0 %v319
          %434 = vmatmul.mubr.f32.gmra.mxu0 %v318
          %v435 = vpop.f32.mrf.mxu0
          %v436 = vadd.f32 0.0, %v435
          %v437 = vpop.f32.mrf.mxu0
          %438 = vmatprep.mubr.f32.mxu0 %v321
          %439 = vmatmul.mubr.f32.gmra.mxu0 %v320
          %v440 = vpop.f32.mrf.mxu0
          %v441 = vadd.f32 0.0, %v440
          %v442 = vpop.f32.mrf.mxu0
          %443 = vmatprep.mubr.f32.mxu0 %v323
          %444 = vmatmul.mubr.f32.gmra.mxu0 %v322
          %v445 = vpop.f32.mrf.mxu0
          %v446 = vadd.f32 0.0, %v445
          %v447 = vpop.f32.mrf.mxu0
          %448 = vmatprep.mubr.f32.mxu0 %v325
          %449 = vmatmul.mubr.f32.gmra.mxu0 %v324
          %v450 = vpop.f32.mrf.mxu0
          %v451 = vadd.f32 0.0, %v450
          %v452 = vpop.f32.mrf.mxu0
          %453 = vmatprep.mubr.f32.mxu0 %v327
          %454 = vmatmul.mubr.f32.gmra.mxu0 %v326
          %v455 = vpop.f32.mrf.mxu0
          %v456 = vadd.f32 0.0, %v455
          %v457 = vpop.f32.mrf.mxu0
          %458 = vmatprep.mubr.f32.mxu0 %v329
          %459 = vmatmul.mubr.f32.gmra.mxu0 %v328
          %v460 = vpop.f32.mrf.mxu0
          %v461 = vadd.f32 0.0, %v460
          %v462 = vpop.f32.mrf.mxu0
          %463 = vmatprep.mubr.f32.mxu0 %v331
          %464 = vmatmul.mubr.f32.gmra.mxu0 %v330
          %v465 = vpop.f32.mrf.mxu0
          %v466 = vadd.f32 0.0, %v465
          %v467 = vpop.f32.mrf.mxu0
          %468 = vdwg.mxu0
          %v469 = vld [vmem:[#allocation3] sm:$0xff]
          %v470 = vadd.f32 %v431, %v436
          %v471 = vadd.f32 %v470, %v441
          %v472 = vadd.f32 %v471, %v446
          %v473 = vadd.f32 %v472, %v451
          %v474 = vadd.f32 %v473, %v456
          %v475 = vadd.f32 %v474, %v461
          %v476 = vadd.f32 %v475, %v466
          %v477 = vadd.f32 %v469, %v476
          %478 = vst [vmem:[#allocation3] sm:$0xff] %v477
          %v479 = vld [vmem:[#allocation4] sm:$0xff]
          %v480 = vmul.f32 %v431, %v431
          %v481 = vmul.f32 %v436, %v436
          %v482 = vmul.f32 %v441, %v441
          %v483 = vmul.f32 %v446, %v446
          %v484 = vmul.f32 %v451, %v451
          %v485 = vmul.f32 %v456, %v456
          %v486 = vmul.f32 %v461, %v461
          %v487 = vmul.f32 %v466, %v466
          %v488 = vadd.f32 %v480, %v481
          %v489 = vadd.f32 %v488, %v482
          %v490 = vadd.f32 %v489, %v483
          %v491 = vadd.f32 %v490, %v484
          %v492 = vadd.f32 %v491, %v485
          %v493 = vadd.f32 %v492, %v486
          %v494 = vadd.f32 %v493, %v487
          %v495 = vadd.f32 %v479, %v494
          %496 = vst [vmem:[#allocation4] sm:$0xff] %v495
          %s497 = smul.u32 %s28, 64
          %s498 = scalar_lea.vmem [#allocation2], %s497
          %499 = vst [vmem:[%s498] sm:$0xff] %v431
          %500 = vst [vmem:[%s498 + $0x8] sm:$0xff] %v436
          %501 = vst [vmem:[%s498 + $0x10] sm:$0xff] %v441
          %502 = vst [vmem:[%s498 + $0x18] sm:$0xff] %v446
          %503 = vst [vmem:[%s498 + $0x20] sm:$0xff] %v451
          %504 = vst [vmem:[%s498 + $0x28] sm:$0xff] %v456
          %505 = vst [vmem:[%s498 + $0x30] sm:$0xff] %v461
          %506 = vst [vmem:[%s498 + $0x38] sm:$0xff] %v466
        $region56: #{tpu_custom_call.1} parent=39 // pred_fallthru
          _
        %p507 = scmp.eq.s32.totalorder %s27, 1
        // Predicated region
        $region61: #{tpu_custom_call.1} parent=39 // pred_check
          %p508 = pneg %p507
        $region62: #{tpu_custom_call.1} parent=39 // pred_check_branch
          %510 = sbr.rel (%p508) target = $region64
        $region63: #{tpu_custom_call.1} parent=39 // pred_region
          %p511 = scmp.eq.s32.totalorder %s28, 0
          // Predicated region
          $region65: #{tpu_custom_call.1} parent=63 // pred_check
            %p512 = pneg %p511
          $region66: #{tpu_custom_call.1} parent=63 // pred_check_branch
            %514 = sbr.rel (%p512) target = $region68
          $region67: #{tpu_custom_call.1} parent=63 // pred_region
            %v515 = vld [vmem:[#allocation3] sm:$0xff]
            %v516 = vrot.slane %v515, 4
            %v517 = vadd.f32 %v515, %v516
            %v518 = vrot.slane %v517, 2
            %v519 = vadd.f32 %v517, %v518
            %v520 = vrot.slane %v519, 1
            %v521 = vadd.f32 %v519, %v520
            %v522 = vld [vmem:[#allocation4] sm:$0xff]
            %v523 = vrot.slane %v522, 4
            %v524 = vadd.f32 %v522, %v523
            %v525 = vrot.slane %v524, 2
            %v526 = vadd.f32 %v524, %v525
            %v527 = vrot.slane %v526, 1
            %v528 = vadd.f32 %v526, %v527
            %v529 = vmul.f32 %v521, 0.00390625
            %v530 = vmul.f32 %v528, 0.00390625
            %v531 = vmul.f32 %v529, %v529
            %v532 = vsub.f32 %v530, %v531
            %v533 = vmax.f32 %v532, 0.0
            %v534 = vld [vmem:[%s2] sm:$0x1]
            %v535 = vadd.f32 %v533, 1e-05
            %v536 = vrsqrt.pop %v535
            %v537 = vmul.f32 %v534, %v536
            %538 = vst [vmem:[#allocation5] sm:$0x1] %v537
            %v539 = vld [vmem:[%s2 + $0x1] sm:$0x1]
            %v540 = vmul.f32 %v529, %v537
            %v541 = vsub.f32 %v539, %v540
            %542 = vst [vmem:[#allocation5 + $0x1] sm:$0x1] %v541
          $region68: #{tpu_custom_call.1} parent=63 // pred_fallthru
            _
          %s543 = smul.u32 %s28, 64
          %s544 = scalar_lea.vmem [#allocation2], %s543
          %v545 = vld [vmem:[%s544] sm:$0xff]
          %v546 = vld [vmem:[%s544 + $0x8] sm:$0xff]
          %v547 = vld [vmem:[%s544 + $0x10] sm:$0xff]
          %v548 = vld [vmem:[%s544 + $0x18] sm:$0xff]
          %v549 = vld [vmem:[%s544 + $0x20] sm:$0xff]
          %v550 = vld [vmem:[%s544 + $0x28] sm:$0xff]
          %v551 = vld [vmem:[%s544 + $0x30] sm:$0xff]
          %v552 = vld [vmem:[%s544 + $0x38] sm:$0xff]
          %v553 = vld [vmem:[#allocation5] sm:$0x1]
          %v554 = vlaneseq
          %v555 = vshrl.u32 %v554, 7
          %v556 = vsub.s32 0, %v555
          %v557 = vrot.slane %v553, %v556
          %v558 = vmul.f32 %v545, %v557
          %v559 = vmul.f32 %v546, %v557
          %v560 = vmul.f32 %v547, %v557
          %v561 = vmul.f32 %v548, %v557
          %v562 = vmul.f32 %v549, %v557
          %v563 = vmul.f32 %v550, %v557
          %v564 = vmul.f32 %v551, %v557
          %v565 = vmul.f32 %v552, %v557
          %v566 = vld [vmem:[#allocation5 + $0x1] sm:$0x1]
          %v567 = vlaneseq
          %v568 = vshrl.u32 %v567, 7
          %v569 = vsub.s32 0, %v568
          %v570 = vrot.slane %v566, %v569
          %v571 = vadd.f32 %v558, %v570
          %v572 = vadd.f32 %v559, %v570
          %v573 = vadd.f32 %v560, %v570
          %v574 = vadd.f32 %v561, %v570
          %v575 = vadd.f32 %v562, %v570
          %v576 = vadd.f32 %v563, %v570
          %v577 = vadd.f32 %v564, %v570
          %v578 = vadd.f32 %v565, %v570
          %v579 = vmax.f32 %v571, 0.0
          %v580 = vmax.f32 %v572, 0.0
          %v581 = vmax.f32 %v573, 0.0
          %v582 = vmax.f32 %v574, 0.0
          %v583 = vmax.f32 %v575, 0.0
          %v584 = vmax.f32 %v576, 0.0
          %v585 = vmax.f32 %v577, 0.0
          %v586 = vmax.f32 %v578, 0.0
          %v587 = vld [vmem:[#allocation11] sm:$0xff]
          %v588 = vld [vmem:[#allocation11 + $0x8] sm:$0xff]
          %v589 = vld [vmem:[#allocation11 + $0x10] sm:$0xff]
          %v590 = vld [vmem:[#allocation11 + $0x18] sm:$0xff]
          %v591 = vld [vmem:[#allocation11 + $0x20] sm:$0xff]
          %v592 = vld [vmem:[#allocation11 + $0x28] sm:$0xff]
          %v593 = vld [vmem:[#allocation11 + $0x30] sm:$0xff]
          %v594 = vld [vmem:[#allocation11 + $0x38] sm:$0xff]
          %v595 = vld [vmem:[#allocation11 + $0x40] sm:$0xff]
          %v596 = vld [vmem:[#allocation11 + $0x48] sm:$0xff]
          %v597 = vld [vmem:[#allocation11 + $0x50] sm:$0xff]
          %v598 = vld [vmem:[#allocation11 + $0x58] sm:$0xff]
          %v599 = vld [vmem:[#allocation11 + $0x60] sm:$0xff]
          %v600 = vld [vmem:[#allocation11 + $0x68] sm:$0xff]
          %v601 = vld [vmem:[#allocation11 + $0x70] sm:$0xff]
          %v602 = vld [vmem:[#allocation11 + $0x78] sm:$0xff]
          %v603 = vld [vmem:[#allocation11 + $0x80] sm:$0xff]
          %v604 = vld [vmem:[#allocation11 + $0x88] sm:$0xff]
          %v605 = vld [vmem:[#allocation11 + $0x90] sm:$0xff]
          %v606 = vld [vmem:[#allocation11 + $0x98] sm:$0xff]
          %v607 = vld [vmem:[#allocation11 + $0xa0] sm:$0xff]
          %v608 = vld [vmem:[#allocation11 + $0xa8] sm:$0xff]
          %v609 = vld [vmem:[#allocation11 + $0xb0] sm:$0xff]
          %v610 = vld [vmem:[#allocation11 + $0xb8] sm:$0xff]
          %v611 = vld [vmem:[#allocation11 + $0xc0] sm:$0xff]
          %v612 = vld [vmem:[#allocation11 + $0xc8] sm:$0xff]
          %v613 = vld [vmem:[#allocation11 + $0xd0] sm:$0xff]
          %v614 = vld [vmem:[#allocation11 + $0xd8] sm:$0xff]
          %v615 = vld [vmem:[#allocation11 + $0xe0] sm:$0xff]
          %v616 = vld [vmem:[#allocation11 + $0xe8] sm:$0xff]
          %v617 = vld [vmem:[#allocation11 + $0xf0] sm:$0xff]
          %v618 = vld [vmem:[#allocation11 + $0xf8] sm:$0xff]
          %v619 = vld [vmem:[%s4] sm:$0x3]
          %v621 = vlaneseq
          %v622 = vshrl.u32 %v621, 7
          %v623 = vsub.s32 0, %v622
          %v624 = vrot.slane %v619, %v623
          %v625 = vlaneseq
          %v626 = vshrl.u32 %v625, 7
          %v627 = vsub.s32 1, %v626
          %v628 = vrot.slane %v619, %v627
          %631 = vmatprep.subr.mxu0 %v618
          %632 = vmatpush1.msra.mxu0 %v617
          %633 = vmatprep.subr.mxu0 %v616
          %634 = vmatpush1.msra.mxu0 %v615
          %635 = vmatprep.subr.mxu0 %v614
          %636 = vmatpush1.msra.mxu0 %v613
          %637 = vmatprep.subr.mxu0 %v612
          %638 = vmatpush1.msra.mxu0 %v611
          %639 = vmatprep.subr.mxu0 %v610
          %640 = vmatpush1.msra.mxu0 %v609
          %641 = vmatprep.subr.mxu0 %v608
          %642 = vmatpush1.msra.mxu0 %v607
          %643 = vmatprep.subr.mxu0 %v606
          %644 = vmatpush1.msra.mxu0 %v605
          %645 = vmatprep.subr.mxu0 %v604
          %646 = vmatpush1.msra.mxu0 %v603
          %647 = vmatprep.subr.mxu0 %v602
          %648 = vmatpush1.msra.mxu0 %v601
          %649 = vmatprep.subr.mxu0 %v600
          %650 = vmatpush1.msra.mxu0 %v599
          %651 = vmatprep.subr.mxu0 %v598
          %652 = vmatpush1.msra.mxu0 %v597
          %653 = vmatprep.subr.mxu0 %v596
          %654 = vmatpush1.msra.mxu0 %v595
          %655 = vmatprep.subr.mxu0 %v594
          %656 = vmatpush1.msra.mxu0 %v593
          %657 = vmatprep.subr.mxu0 %v592
          %658 = vmatpush1.msra.mxu0 %v591
          %659 = vmatprep.subr.mxu0 %v590
          %660 = vmatpush1.msra.mxu0 %v589
          %661 = vmatprep.subr.mxu0 %v588
          %662 = vmatpush1.msra.mxu0 %v587
          %663 = vmatprep.subr.mxu0 0.0
          %664 = vmatpush2.msra.mxu0 0.0
          %665 = vmatprep.subr.mxu0 0.0
          %666 = vmatpush2.msra.mxu0 0.0
          %667 = vmatprep.subr.mxu0 0.0
          %668 = vmatpush2.msra.mxu0 0.0
          %669 = vmatprep.subr.mxu0 0.0
          %670 = vmatpush2.msra.mxu0 0.0
          %671 = vmatprep.subr.mxu0 0.0
          %672 = vmatpush2.msra.mxu0 0.0
          %673 = vmatprep.subr.mxu0 0.0
          %674 = vmatpush2.msra.mxu0 0.0
          %675 = vmatprep.subr.mxu0 0.0
          %676 = vmatpush2.msra.mxu0 0.0
          %677 = vmatprep.subr.mxu0 0.0
          %678 = vmatpush2.msra.mxu0 0.0
          %679 = vmatprep.subr.mxu0 0.0
          %680 = vmatpush2.msra.mxu0 0.0
          %681 = vmatprep.subr.mxu0 0.0
          %682 = vmatpush2.msra.mxu0 0.0
          %683 = vmatprep.subr.mxu0 0.0
          %684 = vmatpush2.msra.mxu0 0.0
          %685 = vmatprep.subr.mxu0 0.0
          %686 = vmatpush2.msra.mxu0 0.0
          %687 = vmatprep.subr.mxu0 0.0
          %688 = vmatpush2.msra.mxu0 0.0
          %689 = vmatprep.subr.mxu0 0.0
          %690 = vmatpush2.msra.mxu0 0.0
          %691 = vmatprep.subr.mxu0 0.0
          %692 = vmatpush2.msra.mxu0 0.0
          %693 = vmatprep.subr.mxu0 0.0
          %694 = vmatpush2.msra.mxu0 0.0
          %695 = vmatprep.mubr.f32.mxu0 0.0
          %696 = vmatmul.mubr.f32.gmra.mxu0 %v579
          %v697 = vpop.f32.mrf.mxu0
          %v698 = vadd.f32 %v624, %v697
          %v699 = vpop.f32.mrf.mxu0
          %v700 = vadd.f32 %v628, %v699
          %701 = vmatprep.mubr.f32.mxu0 0.0
          %702 = vmatmul.mubr.f32.gmra.mxu0 %v580
          %v703 = vpop.f32.mrf.mxu0
          %v704 = vadd.f32 %v624, %v703
          %v705 = vpop.f32.mrf.mxu0
          %v706 = vadd.f32 %v628, %v705
          %707 = vmatprep.mubr.f32.mxu0 0.0
          %708 = vmatmul.mubr.f32.gmra.mxu0 %v581
          %v709 = vpop.f32.mrf.mxu0
          %v710 = vadd.f32 %v624, %v709
          %v711 = vpop.f32.mrf.mxu0
          %v712 = vadd.f32 %v628, %v711
          %713 = vmatprep.mubr.f32.mxu0 0.0
          %714 = vmatmul.mubr.f32.gmra.mxu0 %v582
          %v715 = vpop.f32.mrf.mxu0
          %v716 = vadd.f32 %v624, %v715
          %v717 = vpop.f32.mrf.mxu0
          %v718 = vadd.f32 %v628, %v717
          %719 = vmatprep.mubr.f32.mxu0 0.0
          %720 = vmatmul.mubr.f32.gmra.mxu0 %v583
          %v721 = vpop.f32.mrf.mxu0
          %v722 = vadd.f32 %v624, %v721
          %v723 = vpop.f32.mrf.mxu0
          %v724 = vadd.f32 %v628, %v723
          %725 = vmatprep.mubr.f32.mxu0 0.0
          %726 = vmatmul.mubr.f32.gmra.mxu0 %v584
          %v727 = vpop.f32.mrf.mxu0
          %v728 = vadd.f32 %v624, %v727
          %v729 = vpop.f32.mrf.mxu0
          %v730 = vadd.f32 %v628, %v729
          %731 = vmatprep.mubr.f32.mxu0 0.0
          %732 = vmatmul.mubr.f32.gmra.mxu0 %v585
          %v733 = vpop.f32.mrf.mxu0
          %v734 = vadd.f32 %v624, %v733
          %v735 = vpop.f32.mrf.mxu0
          %v736 = vadd.f32 %v628, %v735
          %737 = vmatprep.mubr.f32.mxu0 0.0
          %738 = vmatmul.mubr.f32.gmra.mxu0 %v586
          %v739 = vpop.f32.mrf.mxu0
          %v740 = vadd.f32 %v624, %v739
          %v741 = vpop.f32.mrf.mxu0
          %v742 = vadd.f32 %v628, %v741
          %743 = vdwg.mxu0
          %744 = vst [vmem:[%s298] sm:$0xff] %v698
          %745 = vst [vmem:[%s298 + $0x8] sm:$0xff] %v700
          %746 = vst [vmem:[%s298 + $0x10] sm:$0xff] %v704
          %747 = vst [vmem:[%s298 + $0x18] sm:$0xff] %v706
          %748 = vst [vmem:[%s298 + $0x20] sm:$0xff] %v710
          %749 = vst [vmem:[%s298 + $0x28] sm:$0xff] %v712
          %750 = vst [vmem:[%s298 + $0x30] sm:$0xff] %v716
          %751 = vst [vmem:[%s298 + $0x38] sm:$0xff] %v718
          %752 = vst [vmem:[%s298 + $0x40] sm:$0xff] %v722
          %753 = vst [vmem:[%s298 + $0x48] sm:$0xff] %v724
          %754 = vst [vmem:[%s298 + $0x50] sm:$0xff] %v728
          %755 = vst [vmem:[%s298 + $0x58] sm:$0xff] %v730
          %756 = vst [vmem:[%s298 + $0x60] sm:$0xff] %v734
          %757 = vst [vmem:[%s298 + $0x68] sm:$0xff] %v736
          %758 = vst [vmem:[%s298 + $0x70] sm:$0xff] %v740
          %759 = vst [vmem:[%s298 + $0x78] sm:$0xff] %v742
        $region64: #{tpu_custom_call.1} parent=39 // pred_fallthru
          _
        %s760 = sand.u32 %s163, 1
        %s761 = scalar_lea.sflag [#allocation8], %s760
        %s762 = sand.u32 %s163, 1
        %s763 = smul.addr %s762, 128
        %s764 = scalar_lea.vmem [#allocation12], %s763
        // Predicated region
        $region69: #{tpu_custom_call.1} parent=39 // pred_check
          %p765 = pneg %p173
        $region70: #{tpu_custom_call.1} parent=39 // pred_check_branch
          %767 = sbr.rel (%p765) target = $region72
        $region71: #{tpu_custom_call.1} parent=39 // pred_region
          %s768 = smul.u32 %s28, %s27
          %s769 = smul.u32 8, %s768
          %s771 = ssub.s32 2048, 2048
          %772 = vsyncadd %s761, %s771
          %s773 = smul.addr %s769, 2
          %s774 = smul.addr %s773, 128
          %s775 = scalar_lea.hbm %s5, %s774
          %s776 = sshll.u32 %s764, 4
          %s777 = int_to_ptr.vmem [resolvable:$true] %s776
          %782 = dma.vmem_to_hbm [thread:$0]  %s777, 2048, %s775, %s761, 256, 256, 16
        $region72: #{tpu_custom_call.1} parent=39 // pred_fallthru
          _
      $region40: #{tpu_custom_call.1} parent=5 // pred_fallthru
        _
      %p783 = scmp.le.s32.totalorder 2, %s18
      // Predicated region
      $region73: #{tpu_custom_call.1} parent=5 // pred_check
        %p784 = pneg %p783
      $region74: #{tpu_custom_call.1} parent=5 // pred_check_branch
        %786 = sbr.rel (%p784) target = $region76
      $region75: #{tpu_custom_call.1} parent=5 // pred_region
        %s787 = ssub.s32 %s18, 2
        // Predicated region
        $region77: #{tpu_custom_call.1} parent=75 // pred_check
          %p788 = pneg %p179
        $region78: #{tpu_custom_call.1} parent=75 // pred_check_branch
          %790 = sbr.rel (%p788) target = $region80
        $region79: #{tpu_custom_call.1} parent=75 // pred_region
          %s791 = sand.u32 %s164, 1
          %s792 = scalar_lea.sflag [#allocation8], %s791
          %s793 = sand.u32 %s164, 1
          %s794 = smul.addr %s793, 128
          %s795 = scalar_lea.vmem [#allocation12], %s794
          %796 = dma.done %s792, 2048
        $region80: #{tpu_custom_call.1} parent=75 // pred_fallthru
          _
      $region76: #{tpu_custom_call.1} parent=5 // pred_fallthru
        _
    $region6: #{tpu_custom_call.1} parent=1 // loop_footer
      %s22 = sadd.s32 1, %s18
    $region7: #{tpu_custom_call.1} parent=1 // loop_footer_branch
      %17 = sbr.rel target = $region3
    $region8: #{tpu_custom_call.1} parent=1 // loop_exit
      _
    %797 = vsyncpa [#allocation7], 1
    %s798 = scalar_lea.sflag [#allocation7], 1
    %799 = vsyncpa %s798, 1
    %800 = vsyncpa [#allocation10], 1
    %801 = vsyncpa [#allocation8], 1
    %s802 = scalar_lea.sflag [#allocation8], 1
    %803 = vsyncpa %s802, 1

</llo_original>
